<compile_context>
chip_gen: v7x
topology: tpu7x:2x2x1
jax: 0.10.0
libtpu: 0.0.40
codegen_flags: <defaults>
</compile_context>

<pallas_src>
import functools
import math

import jax
import jax.numpy as jnp
from jax.experimental import pallas as pl
from jax.experimental.pallas import tpu as pltpu

_LN2 = math.log(2.0)


def _round_up(x, m):
    return ((x + m - 1) // m) * m


def _cdiv(a, b):
    return (a + b - 1) // b


def _vmem_budget():
    """(input-pipeline budget, vmem_limit_bytes) — conservative unless a 128 MiB part is detected."""
    big = False
    try:
        cap = int(pltpu.get_tpu_info().vmem_capacity_bytes)
        big = cap >= 100 * 1024 * 1024          # v5e / v6e: 128 MiB physical VMEM
    except Exception:
        big = False
    try:
        if "v7" in jax.devices()[0].device_kind.lower():
            big = False                          # v7x: 64 MiB per TensorCore
    except Exception:
        pass
    if big:
        return 56 * 1024 * 1024, 80 * 1024 * 1024
    return 32 * 1024 * 1024, 48 * 1024 * 1024


def _bce_partial_kernel(preds_ref, gts_ref, *out_refs,
                        use_batch_weight, batch, tile_b,
                        n_b_per_split, n_b_total, need_row_mask, has_skip):
    s = pl.program_id(0)          # core-split axis ("parallel")
    i = pl.program_id(1)          # batch-block axis ("arbitrary", reduction)

    @pl.when(i == 0)
    def _init():
        for r in out_refs:
            r[...] = jnp.zeros_like(r)

    def _accumulate():
        x = preds_ref[...].astype(jnp.float32)       # (tile_b, D) logits
        y = gts_ref[...].astype(jnp.float32)         # (tile_b, D) labels
        if need_row_mask:
            g = s * n_b_per_split + i                # global batch-block index
            rows = jax.lax.broadcasted_iota(jnp.int32, x.shape, 0) + g * tile_b
            valid = rows < batch
            # Select (not multiply): out-of-bounds rows may contain garbage / NaN.
            x = jnp.where(valid, x, 0.0)
            y = jnp.where(valid, y, 0.0)
        # Stable softplus(-x) = max(-x, 0) + log1p(exp(-|x|)).
        sp = jnp.maximum(-x, 0.0) + jnp.log1p(jnp.exp(-jnp.abs(x)))
        t1 = (1.0 - y) * x + sp                      # S1 integrand
        t2 = y * sp                                  # S2 integrand

        def _acc(ref, v):
            if tile_b % 8 == 0:
                # (8, D) accumulation: sublane-group adds only, no per-step XLU reduce.
                ref[...] += v.reshape(tile_b // 8, 8, v.shape[-1]).sum(axis=0)
            else:
                ref[0:1, :] += jnp.sum(v, axis=0, keepdims=True)

        _acc(out_refs[0], t1)
        _acc(out_refs[1], t2)
        if use_batch_weight:
            _acc(out_refs[2], y)                     # S3 = sum of labels

    if has_skip:
        # Trailing "extra" step of the 2-way split: its (clamped, duplicate) block must
        # not be double-counted.
        pl.when(s * n_b_per_split + i < n_b_total)(_accumulate)
    else:
        _accumulate()


def final_classification_loss(class_label_preds, class_label_gts, pos_weight=None,
                              use_batch_weight=False, redundent=False,
                              tile_b=None, n_split=None):
    """Mirrors FinalClassificationLoss.forward.

    class_label_preds: (B, D) logits (f32 or bf16)
    class_label_gts:   (B, D) labels (f32 / bf16 / int — 0/1)
    pos_weight:        (D,)   per-class positive weight (unused if use_batch_weight)
    Returns the scalar sum of per-class losses (or the per-class losses if redundent).
    """
    preds = jnp.asarray(class_label_preds)
    gts = jnp.asarray(class_label_gts)
    assert preds.ndim == 2 and preds.shape == gts.shape
    B, D = preds.shape

    pipe_budget, vmem_limit = _vmem_budget()
    itemsize_sum = jnp.dtype(preds.dtype).itemsize + jnp.dtype(gts.dtype).itemsize

    # Batch tile: largest so double-buffered inputs + f32 elementwise temporaries fit the
    # per-generation budget.  Full-extent block if the batch is small.
    # TODO(synk): for extremely large D (>~100k classes) add a class-tiled fallback.
    if tile_b is None:
        bytes_per_row = D * (2 * itemsize_sum + 24)      # 2x dbl-buffered inputs + ~6 f32 temps
        tb = max(32, (pipe_budget // bytes_per_row) // 32 * 32)
    else:
        tb = max(8, _round_up(int(tile_b), 8))
    if tb >= B:
        tb = B
    tile_b = int(tb)

    n_b_total = _cdiv(B, tile_b)
    if n_split is None:
        n_split = 2 if n_b_total >= 2 else 1             # use both v7x TensorCores
    n_split = max(1, min(int(n_split), n_b_total))

    # Prefer an even block count so the 2-way split has no duplicate (skipped) block.
    if n_split == 2 and n_b_total % 2 != 0 and tile_b < B and tile_b % 32 == 0:
        t2 = max(32, _round_up(_cdiv(B, n_b_total + 1), 32))
        if t2 < B and _cdiv(B, t2) % 2 == 0:
            tile_b = t2
            n_b_total = _cdiv(B, tile_b)

    n_b_per_split = _cdiv(n_b_total, n_split)
    has_skip = n_split * n_b_per_split > n_b_total
    need_row_mask = (B % tile_b) != 0
    n_out = 3 if use_batch_weight else 2

    kernel = functools.partial(
        _bce_partial_kernel,
        use_batch_weight=bool(use_batch_weight), batch=B, tile_b=tile_b,
        n_b_per_split=n_b_per_split, n_b_total=n_b_total,
        need_row_mask=need_row_mask, has_skip=has_skip)

    def in_map(s, i):
        # Clamp so a trailing extra step of the split re-reads a valid block
        # (its contribution is skipped inside the kernel).
        return (jnp.minimum(s * n_b_per_split + i, n_b_total - 1), 0)

    in_spec = pl.BlockSpec((tile_b, D), in_map)
    out_spec = pl.BlockSpec((8, D), lambda s, i: (s, 0))

    partials = pl.pallas_call(
        kernel,
        out_shape=tuple(jax.ShapeDtypeStruct((n_split * 8, D), jnp.float32)
                        for _ in range(n_out)),
        grid=(n_split, n_b_per_split),
        in_specs=[in_spec, in_spec],
        out_specs=tuple(out_spec for _ in range(n_out)),
        compiler_params=pltpu.CompilerParams(
            dimension_semantics=("parallel", "arbitrary"),
            vmem_limit_bytes=vmem_limit),
    )(preds, gts)

    # ---- tiny per-class finalize (plain XLA over D elements) ----
    s1 = jnp.sum(partials[0], axis=0)
    s2 = jnp.sum(partials[1], axis=0)
    n_pad = n_b_total * tile_b - B
    if n_pad:
        s1 = s1 - jnp.float32(n_pad * _LN2)              # padded rows add softplus(0) to S1
    inv_b = jnp.float32(1.0 / B)
    if use_batch_weight:
        s3 = jnp.sum(partials[2], axis=0)
        safe = jnp.where(s3 == 0.0, 1.0, s3)
        pw = (jnp.float32(B) - s3) / safe                # (B - sum(y)) / sum(y)
        per_class = jnp.where(s3 == 0.0, 0.0, (s1 + (pw - 1.0) * s2) * inv_b)
    else:
        pw = jnp.asarray(pos_weight, jnp.float32).reshape(-1)
        per_class = (s1 + (pw - 1.0) * s2) * inv_b

    if redundent:
        return per_class
    return jnp.sum(per_class)


def _reference(preds, gts, pos_weight, use_batch_weight):
    # Pure-JAX reference of the PyTorch forward (per-class losses).
    preds = preds.astype(jnp.float32)
    gts = gts.astype(jnp.float32)
    B = preds.shape[0]
    sp = jnp.maximum(-preds, 0.0) + jnp.log1p(jnp.exp(-jnp.abs(preds)))
    if use_batch_weight:
        sy = jnp.sum(gts, axis=0)
        pw = jnp.where(sy == 0, 0.0, (B - sy) / jnp.where(sy == 0, 1.0, sy))
        valid = jnp.where(sy == 0, 0.0, 1.0)
    else:
        pw = jnp.asarray(pos_weight, jnp.float32)
        valid = jnp.ones_like(pw)
    per_elem = (1.0 - gts) * preds + ((pw[None, :] - 1.0) * gts + 1.0) * sp
    return jnp.mean(per_elem, axis=0) * valid


if __name__ == "__main__":
    key = jax.random.PRNGKey(0)
    k1, k2, k3, k4 = jax.random.split(key, 4)

    # ---- test 1: tiny shape, single full-extent block, bf16 labels, both weighting modes ----
    B, D = 8, 16
    preds = jax.random.normal(k1, (B, D), dtype=jnp.float32)
    gts = (jax.random.uniform(k2, (B, D)) > 0.5).astype(jnp.bfloat16)
    gts = gts.at[:, 3].set(0)          # all-negative class -> exercises sum(y)==0 branch
    pos_weight = 0.5 + jnp.arange(D, dtype=jnp.float32) * 0.25

    out = final_classification_loss(preds, gts, pos_weight, use_batch_weight=False)
    jax.block_until_ready(out)
    ref = jnp.sum(_reference(preds, gts, pos_weight, False))
    assert jnp.allclose(out, ref, rtol=1e-4, atol=1e-4), (out, ref)

    out_pc = final_classification_loss(preds, gts, pos_weight,
                                       use_batch_weight=True, redundent=True)
    jax.block_until_ready(out_pc)
    ref_pc = _reference(preds, gts, pos_weight, True)
    assert jnp.allclose(out_pc, ref_pc, rtol=1e-4, atol=1e-4), (out_pc, ref_pc)

    # ---- test 2: ragged batch, forced multi-block grid, 2-way split with a skipped
    #             duplicate block, non-multiple-of-128 class width ----
    B2, D2 = 45, 200
    preds2 = jax.random.normal(k3, (B2, D2), dtype=jnp.float32)
    gts2 = (jax.random.uniform(k4, (B2, D2)) > 0.5).astype(jnp.float32)
    pw2 = jnp.full((D2,), 1.5, jnp.float32)

    out2 = final_classification_loss(preds2, gts2, pw2, use_batch_weight=False, tile_b=16)
    jax.block_until_ready(out2)
    ref2 = jnp.sum(_reference(preds2, gts2, pw2, False))
    assert jnp.allclose(out2, ref2, rtol=1e-4, atol=1e-4), (out2, ref2)

    out2b = final_classification_loss(preds2, gts2, pw2, use_batch_weight=True, tile_b=16)
    jax.block_until_ready(out2b)
    ref2b = jnp.sum(_reference(preds2, gts2, pw2, True))
    assert jnp.allclose(out2b, ref2b, rtol=1e-4, atol=1e-4), (out2b, ref2b)

    print("KERNEL_OK")
</pallas_src>

<mosaic_0001>
module attributes {stable_mosaic.version = 11 : i64} {
  func.func @_bce_partial_kernel(%arg0: i32, %arg1: i32, %arg2: memref<8x16xf32, #tpu.memory_space<vmem>>, %arg3: memref<8x16xbf16, #tpu.memory_space<vmem>>, %arg4: memref<8x16xf32, #tpu.memory_space<vmem>>, %arg5: memref<8x16xf32, #tpu.memory_space<vmem>>) attributes {dimension_semantics = [#tpu.dimension_semantics<parallel>, #tpu.dimension_semantics<arbitrary>], iteration_bounds = array<i64: 1, 1>, scalar_prefetch = 0 : i64, scratch_operands = 0 : i64, tpu.core_type = #tpu.core_type<tc>, window_params = [{transform_indices = @transform_0, window_bounds = array<i64: 8, 16>}, {transform_indices = @transform_1, window_bounds = array<i64: 8, 16>}, {transform_indices = @transform_2, window_bounds = array<i64: 8, 16>}, {transform_indices = @transform_3, window_bounds = array<i64: 8, 16>}]} {
    %c0_i32 = arith.constant 0 : i32
    %0 = arith.cmpi eq, %arg1, %c0_i32 : i32
    %1 = arith.extui %0 : i1 to i32
    %c0_i32_0 = arith.constant 0 : i32
    %2 = arith.cmpi ne, %1, %c0_i32_0 : i32
    scf.if %2 {
      %cst_17 = arith.constant 0.000000e+00 : f32
      %31 = vector.broadcast %cst_17 : f32 to vector<8x16xf32>
      %c0_18 = arith.constant 0 : index
      %c0_19 = arith.constant 0 : index
      %32 = vector.load %arg4[%c0_18, %c0_19] : memref<8x16xf32, #tpu.memory_space<vmem>>, vector<8x16xf32>
      tpu.vector_store %arg4[%c0_18, %c0_19], %31 {strides = array<i32>} : memref<8x16xf32, #tpu.memory_space<vmem>>, vector<8x16xf32>,
      %cst_20 = arith.constant 0.000000e+00 : f32
      %33 = vector.broadcast %cst_20 : f32 to vector<8x16xf32>
      %c0_21 = arith.constant 0 : index
      %c0_22 = arith.constant 0 : index
      %34 = vector.load %arg5[%c0_21, %c0_22] : memref<8x16xf32, #tpu.memory_space<vmem>>, vector<8x16xf32>
      tpu.vector_store %arg5[%c0_21, %c0_22], %33 {strides = array<i32>} : memref<8x16xf32, #tpu.memory_space<vmem>>, vector<8x16xf32>,
    } else {
    }
    %c0 = arith.constant 0 : index
    %c0_1 = arith.constant 0 : index
    %3 = vector.load %arg2[%c0, %c0_1] : memref<8x16xf32, #tpu.memory_space<vmem>>, vector<8x16xf32>
    %c0_2 = arith.constant 0 : index
    %c0_3 = arith.constant 0 : index
    %4 = vector.load %arg3[%c0_2, %c0_3] : memref<8x16xbf16, #tpu.memory_space<vmem>>, vector<8x16xbf16>
    %5 = arith.extf %4 : vector<8x16xbf16> to vector<8x16xf32>
    %cst = arith.constant 0.000000e+00 : f32
    %6 = vector.broadcast %cst : f32 to vector<8x16xf32>
    %7 = arith.subf %6, %3 : vector<8x16xf32>
    %cst_4 = arith.constant 0.000000e+00 : f32
    %8 = vector.broadcast %cst_4 : f32 to vector<8x16xf32>
    %9 = arith.maximumf %7, %8 : vector<8x16xf32>
    %10 = math.absf %3 : vector<8x16xf32>
    %cst_5 = arith.constant 0.000000e+00 : f32
    %11 = vector.broadcast %cst_5 : f32 to vector<8x16xf32>
    %12 = arith.subf %11, %10 : vector<8x16xf32>
    %13 = math.exp %12 : vector<8x16xf32>
    %14 = math.log1p %13 : vector<8x16xf32>
    %15 = arith.addf %9, %14 : vector<8x16xf32>
    %cst_6 = arith.constant 1.000000e+00 : f32
    %16 = vector.broadcast %cst_6 : f32 to vector<8x16xf32>
    %17 = arith.subf %16, %5 : vector<8x16xf32>
    %18 = arith.mulf %17, %3 : vector<8x16xf32>
    %19 = arith.addf %18, %15 : vector<8x16xf32>
    %20 = arith.mulf %5, %15 : vector<8x16xf32>
    %c0_7 = arith.constant 0 : index
    %c0_8 = arith.constant 0 : index
    %21 = vector.load %arg4[%c0_7, %c0_8] : memref<8x16xf32, #tpu.memory_space<vmem>>, vector<8x16xf32>
    %22 = vector.shape_cast %19 : vector<8x16xf32> to vector<1x8x16xf32>
    %cst_9 = arith.constant dense<0.000000e+00> : vector<8x16xf32>
    %23 = vector.multi_reduction <add>, %22, %cst_9 [0] : vector<1x8x16xf32> to vector<8x16xf32>
    %24 = arith.addf %21, %23 : vector<8x16xf32>
    %c0_10 = arith.constant 0 : index
    %c0_11 = arith.constant 0 : index
    %25 = vector.load %arg4[%c0_10, %c0_11] : memref<8x16xf32, #tpu.memory_space<vmem>>, vector<8x16xf32>
    tpu.vector_store %arg4[%c0_10, %c0_11], %24 {strides = array<i32>} : memref<8x16xf32, #tpu.memory_space<vmem>>, vector<8x16xf32>,
    %c0_12 = arith.constant 0 : index
    %c0_13 = arith.constant 0 : index
    %26 = vector.load %arg5[%c0_12, %c0_13] : memref<8x16xf32, #tpu.memory_space<vmem>>, vector<8x16xf32>
    %27 = vector.shape_cast %20 : vector<8x16xf32> to vector<1x8x16xf32>
    %cst_14 = arith.constant dense<0.000000e+00> : vector<8x16xf32>
    %28 = vector.multi_reduction <add>, %27, %cst_14 [0] : vector<1x8x16xf32> to vector<8x16xf32>
    %29 = arith.addf %26, %28 : vector<8x16xf32>
    %c0_15 = arith.constant 0 : index
    %c0_16 = arith.constant 0 : index
    %30 = vector.load %arg5[%c0_15, %c0_16] : memref<8x16xf32, #tpu.memory_space<vmem>>, vector<8x16xf32>
    tpu.vector_store %arg5[%c0_15, %c0_16], %29 {strides = array<i32>} : memref<8x16xf32, #tpu.memory_space<vmem>>, vector<8x16xf32>,
    return
  }
  func.func @transform_0(%arg0: i32, %arg1: i32) -> (i32, i32) {
    %c1_i32 = arith.constant 1 : i32
    %0 = arith.muli %arg0, %c1_i32 : i32
    %1 = arith.addi %0, %arg1 : i32
    %c0_i32 = arith.constant 0 : i32
    %2 = arith.minsi %1, %c0_i32 : i32
    %c0_i32_0 = arith.constant 0 : i32
    %c0_i32_1 = arith.constant 0 : i32
    return %2, %c0_i32_0 : i32, i32
  }
  func.func @transform_1(%arg0: i32, %arg1: i32) -> (i32, i32) {
    %c1_i32 = arith.constant 1 : i32
    %0 = arith.muli %arg0, %c1_i32 : i32
    %1 = arith.addi %0, %arg1 : i32
    %c0_i32 = arith.constant 0 : i32
    %2 = arith.minsi %1, %c0_i32 : i32
    %c0_i32_0 = arith.constant 0 : i32
    %c0_i32_1 = arith.constant 0 : i32
    return %2, %c0_i32_0 : i32, i32
  }
  func.func @transform_2(%arg0: i32, %arg1: i32) -> (i32, i32) {
    %c0_i32 = arith.constant 0 : i32
    %c0_i32_0 = arith.constant 0 : i32
    return %arg0, %c0_i32 : i32, i32
  }
  func.func @transform_3(%arg0: i32, %arg1: i32) -> (i32, i32) {
    %c0_i32 = arith.constant 0 : i32
    %c0_i32_0 = arith.constant 0 : i32
    return %arg0, %c0_i32 : i32, i32
  }
}

</mosaic_0001>

<llo_original>
// kernel: tpu_custom_call.1
$region0: #{tpu_custom_call.1}
  #allocation0 [shape = 'u32[]', space=smem, size = 0x4, offset = 0x4, fixed_abs, tag = 'smem constant byte address 0x4 - core index']
  #allocation1 [shape = 'u32[144,128]{1,0:T(1,128)}', space=vmem, size = 0x12000, scoped, tag = 'internal scratch']
  %s0 = inlined_call_operand.hbm [shape: f32[8,16], index: 0, kind: input, shape index: {}]
  %s1 = inlined_call_operand.hbm [shape: bf16[8,16], index: 1, kind: input, shape index: {}]
  %s2 = inlined_call_operand.hbm [shape: f32[8,16], index: 2, kind: output, shape index: {0}]
  %s3 = inlined_call_operand.hbm [shape: f32[8,16], index: 3, kind: output, shape index: {1}]
  %4 = xla_tuple %s2, %s3
  %s5 = sld [smem:[#allocation0]]
  $region38: #{tpu_custom_call.1} parent=0
    _
  %s7 = ssub.s32 1, %s5
  %s8 = scalar_select 0, %s7, %s5
  $region1: #{tpu_custom_call.1} parent=0
    #allocation2 [shape = 'u8[4096]{0}', space=vmem, size = 0x1000, scoped, tag = 'input window, operand 0, single buffered']
    #allocation3 [shape = 's32[1]{0}', space=sflag, size = 0x4, scoped, tag = 'scoped memory for tpu_custom_call.1']
    #allocation4 [shape = 's32[1]{0}', space=sflag, size = 0x4, scoped, tag = 'scoped memory for tpu_custom_call.1']
    #allocation5 [shape = 'u8[2048]{0}', space=vmem, size = 0x800, scoped, tag = 'input window, operand 1, single buffered']
    #allocation6 [shape = 's32[1]{0}', space=sflag, size = 0x4, scoped, tag = 'scoped memory for tpu_custom_call.1']
    #allocation7 [shape = 'u8[4096]{0}', space=vmem, size = 0x1000, scoped, tag = 'output window, operand 0, single buffered']
    #allocation8 [shape = 'u8[4096]{0}', space=vmem, size = 0x1000, scoped, tag = 'output window, operand 1, single buffered']
    #allocation9 [shape = 's32[1]{0}', space=sflag, size = 0x4, scoped, tag = 'scoped memory for tpu_custom_call.1']
    %9 = vsyncpa [#allocation3], 0
    %10 = vsyncpa [#allocation6], 0
    %11 = vsyncpa [#allocation4], 0
    %12 = vsyncpa [#allocation9], 0
    // Predicated region
    $region2: #{tpu_custom_call.1} parent=1 // pred_check
      _
    $region3: #{tpu_custom_call.1} parent=1 // pred_check_branch
      %14 = sbr.rel (0) target = $region5
    $region4: #{tpu_custom_call.1} parent=1 // pred_region
      %s15 = sadd.s32 0, 0
      %p16 = scmp.lt.s32.totalorder %s15, 0
      %s17 = scalar_select %p16, %s15, 0
      %s19 = ssub.s32 128, 128
      %20 = vsyncadd [#allocation3], %s19
      %s21 = smul.addr %s17, 128
      %s22 = scalar_lea.hbm %s0, %s21
      %s24 = sshll.u32 [#allocation2], 4
      %s25 = int_to_ptr.vmem [resolvable:$true] %s24
      %27 = dma.hbm_to_vmem [thread:$0]  %s22, 128, %s25, [#allocation3]
    $region5: #{tpu_custom_call.1} parent=1 // pred_fallthru
      _
    // Predicated region
    $region6: #{tpu_custom_call.1} parent=1 // pred_check
      _
    $region7: #{tpu_custom_call.1} parent=1 // pred_check_branch
      %29 = sbr.rel (0) target = $region9
    $region8: #{tpu_custom_call.1} parent=1 // pred_region
      %s30 = sadd.s32 0, 0
      %p31 = scmp.lt.s32.totalorder %s30, 0
      %s32 = scalar_select %p31, %s30, 0
      %s34 = ssub.s32 64, 64
      %35 = vsyncadd [#allocation6], %s34
      %s36 = smul.addr %s32, 64
      %s37 = scalar_lea.hbm %s1, %s36
      %s39 = sshll.u32 [#allocation5], 4
      %s40 = int_to_ptr.vmem [resolvable:$true] %s39
      %42 = dma.hbm_to_vmem [thread:$0]  %s37, 64, %s40, [#allocation6]
    $region9: #{tpu_custom_call.1} parent=1 // pred_fallthru
      _
    // Predicated region
    $region10: #{tpu_custom_call.1} parent=1 // pred_check
      _
    $region11: #{tpu_custom_call.1} parent=1 // pred_check_branch
      %44 = sbr.rel (0) target = $region13
    $region12: #{tpu_custom_call.1} parent=1 // pred_region
      %45 = dma.done [#allocation3], 128
    $region13: #{tpu_custom_call.1} parent=1 // pred_fallthru
      _
    // Predicated region
    $region14: #{tpu_custom_call.1} parent=1 // pred_check
      _
    $region15: #{tpu_custom_call.1} parent=1 // pred_check_branch
      %47 = sbr.rel (0) target = $region17
    $region16: #{tpu_custom_call.1} parent=1 // pred_region
      %48 = dma.done [#allocation6], 64
    $region17: #{tpu_custom_call.1} parent=1 // pred_fallthru
      _
    %s49 = sadd.s32 0, 0
    %p50 = scmp.lt.s32.totalorder %s49, 0
    %s51 = scalar_select %p50, %s49, 0
    %s52 = sadd.s32 0, 0
    %p53 = scmp.lt.s32.totalorder %s52, 0
    %s54 = scalar_select %p53, %s52, 0
    %p55 = scmp.eq.s32.totalorder 0, 0
    // Predicated region
    $region18: #{tpu_custom_call.1} parent=1 // pred_check
      %p56 = pneg %p55
    $region19: #{tpu_custom_call.1} parent=1 // pred_check_branch
      %58 = sbr.rel (%p56) target = $region21
    $region20: #{tpu_custom_call.1} parent=1 // pred_region
      %vm59 = vcmask 130048
      %60 = vst.msk [vmem:[#allocation7] sm:$0xff] %vm59, 0.0
      %61 = vst.msk [vmem:[#allocation8] sm:$0xff] %vm59, 0.0
    $region21: #{tpu_custom_call.1} parent=1 // pred_fallthru
      _
    %v62 = vld [vmem:[#allocation2] sm:$0xff]
    %v63 = vld [vmem:[#allocation5] sm:$0xf]
    %v64 = vunpack.c.l.bf16 %v63
    %v65 = vsub.f32 0.0, %v62
    %v66 = vmax.f32 %v65, 0.0
    %v67 = vand.u32 2147483647, %v62
    %v68 = vsub.f32 0.0, %v67
    %v69 = vmul.f32 %v68, 1.442695
    %v70 = vpow.pop %v69
    %v71 = vadd.f32 %v70, 1.0
    %v72 = vlog2.pop %v71
    %v73 = vmul.f32 %v72, 0.6931472
    %v74 = vmul.f32 -0.5, %v70
    %v75 = vadd.f32 %v74, 1.0
    %v76 = vmul.f32 %v75, %v70
    %v77 = vand.u32 2147483647, %v70
    %vm78 = vcmp.lt.f32.partialorder %v77, 0.0004427343
    %v79 = vsel %vm78, %v76, %v73
    %v80 = vadd.f32 %v66, %v79
    %v81 = vsub.f32 1.0, %v64
    %v82 = vmul.f32 %v81, %v62
    %v83 = vadd.f32 %v82, %v80
    %v84 = vmul.f32 %v64, %v80
    %v85 = vld [vmem:[#allocation7] sm:$0xff]
    %v86 = vadd.f32 %v83, 0.0
    %v87 = vadd.f32 %v85, %v86
    %vm88 = vcmask 130048
    %89 = vst.msk [vmem:[#allocation7] sm:$0xff] %vm88, %v87
    %v90 = vld [vmem:[#allocation8] sm:$0xff]
    %v91 = vadd.f32 %v84, 0.0
    %v92 = vadd.f32 %v90, %v91
    %93 = vst.msk [vmem:[#allocation8] sm:$0xff] %vm88, %v92
    // Predicated region
    $region22: #{tpu_custom_call.1} parent=1 // pred_check
      _
    $region23: #{tpu_custom_call.1} parent=1 // pred_check_branch
      %95 = sbr.rel (0) target = $region25
    $region24: #{tpu_custom_call.1} parent=1 // pred_region
      %s97 = ssub.s32 128, 128
      %98 = vsyncadd [#allocation4], %s97
      %s100 = sshll.u32 [#allocation7], 4
      %s101 = int_to_ptr.vmem [resolvable:$true] %s100
      %103 = dma.vmem_to_hbm [thread:$0]  %s101, 128, %s2, [#allocation4]
    $region25: #{tpu_custom_call.1} parent=1 // pred_fallthru
      _
    // Predicated region
    $region26: #{tpu_custom_call.1} parent=1 // pred_check
      _
    $region27: #{tpu_custom_call.1} parent=1 // pred_check_branch
      %105 = sbr.rel (0) target = $region29
    $region28: #{tpu_custom_call.1} parent=1 // pred_region
      %s107 = ssub.s32 128, 128
      %108 = vsyncadd [#allocation9], %s107
      %s110 = sshll.u32 [#allocation8], 4
      %s111 = int_to_ptr.vmem [resolvable:$true] %s110
      %113 = dma.vmem_to_hbm [thread:$0]  %s111, 128, %s3, [#allocation9]
    $region29: #{tpu_custom_call.1} parent=1 // pred_fallthru
      _
    // Predicated region
    $region30: #{tpu_custom_call.1} parent=1 // pred_check
      _
    $region31: #{tpu_custom_call.1} parent=1 // pred_check_branch
      %115 = sbr.rel (0) target = $region33
    $region32: #{tpu_custom_call.1} parent=1 // pred_region
      %116 = dma.done [#allocation4], 128
    $region33: #{tpu_custom_call.1} parent=1 // pred_fallthru
      _
    // Predicated region
    $region34: #{tpu_custom_call.1} parent=1 // pred_check
      _
    $region35: #{tpu_custom_call.1} parent=1 // pred_check_branch
      %118 = sbr.rel (0) target = $region37
    $region36: #{tpu_custom_call.1} parent=1 // pred_region
      %119 = dma.done [#allocation9], 128
    $region37: #{tpu_custom_call.1} parent=1 // pred_fallthru
      _
    %120 = vsyncpa [#allocation3], 1
    %121 = vsyncpa [#allocation6], 1
    %122 = vsyncpa [#allocation4], 1
    %123 = vsyncpa [#allocation9], 1

</llo_original>
